<compile_context>
chip_gen: v7x
topology: tpu7x:2x2x1
jax: 0.10.0
libtpu: 0.0.40
codegen_flags: <defaults>
</compile_context>

<pallas_src>
import jax
import jax.numpy as jnp
from jax.experimental import pallas as pl
from jax.experimental.pallas import tpu as pltpu


def _round_up(x, m):
    return ((x + m - 1) // m) * m


def _critic_kernel(x_ref, w1_ref, b1_ref, w2_ref, b2_ref, w3r_ref, b3_ref, out_ref):
    # Fused 3-layer MLP on one (TB, obs_dim) batch tile.
    x = x_ref[...]                                                   # (TB, obs_dim), bf16/f32

    # Layer 1: MXU matmul (f32 accumulate), bias + tanh in f32.
    h1 = jnp.dot(x, w1_ref[...], preferred_element_type=jnp.float32) + b1_ref[...]
    h1 = jnp.tanh(h1)                                                # f32 (v5e: no bf16 VPU/EUP)

    # Layer 2: cast only at the MXU boundary.
    h2 = jnp.dot(h1.astype(w2_ref.dtype), w2_ref[...],
                 preferred_element_type=jnp.float32) + b2_ref[...]
    h2 = jnp.tanh(h2)                                                # f32

    # Layer 3: (1, H2) x (TB, H2)^T NT matmul -> lane-dense (1, TB) value row.
    v = jax.lax.dot_general(
        w3r_ref[...], h2.astype(w3r_ref.dtype),
        dimension_numbers=(((1,), (1,)), ((), ())),                  # contract H2 with H2
        preferred_element_type=jnp.float32,
    ) + b3_ref[...]                                                  # (1, TB) f32

    out_ref[...] = v.astype(out_ref.dtype)                           # unmasked lane-dense store


def mlp_critic_forward(obs, params, *, tile_b=1024):
    """obs: (B, obs_dim). params: W1,b1,W2,b2,W3r,b3 (see init_params).
    Returns value estimates of shape (B,) in f32 (like torch.squeeze(v_net(obs), -1))."""
    B, obs_dim = obs.shape
    w1, b1 = params["W1"], params["b1"]
    w2, b2 = params["W2"], params["b2"]
    w3r, b3 = params["W3r"], params["b3"]

    # Feed the MXU the weights' dtype (bf16 halves the dominant obs HBM stream).
    obs = obs.astype(w1.dtype)

    # Batch tile: multiple of 128 (lane-dense output + sublane alignment); pad B up.
    TB = min(_round_up(tile_b, 128), _round_up(B, 128))
    B_pad = _round_up(B, TB)
    if B_pad != B:
        obs = jnp.pad(obs, ((0, B_pad - B), (0, 0)))
    n_tiles = B_pad // TB

    # Constant index_map: fetched once, VMEM-resident for the whole grid.
    const = lambda a: pl.BlockSpec(a.shape, lambda i: (0,) * a.ndim)

    out = pl.pallas_call(
        _critic_kernel,
        out_shape=jax.ShapeDtypeStruct((1, B_pad), jnp.float32),
        grid=(n_tiles,),
        in_specs=[
            pl.BlockSpec((TB, obs_dim), lambda i: (i, 0)),    # streamed obs tiles
            const(w1), const(b1), const(w2), const(b2), const(w3r), const(b3),
        ],
        out_specs=pl.BlockSpec((1, TB), lambda i: (0, i)),    # lane-dense value row
        compiler_params=pltpu.CompilerParams(
            dimension_semantics=("parallel",),                # v7x: shard batch over 2 TCs
        ),
    )(obs, w1, b1, w2, b2, w3r, b3)

    return out[0, :B]                                         # squeeze(-1) + drop padding


def init_params(key, obs_dim, hidden_sizes, param_dtype=jnp.bfloat16):
    """nn.Linear-style init (U[-1/sqrt(fan_in), 1/sqrt(fan_in)]).
    W1/W2 stored (in, out) in param_dtype; last layer stored as a (1, H2) row.
    Biases kept in f32 (activation math stays f32 inside the kernel)."""
    # TODO(synk): kernel is specialized to exactly 2 hidden layers (as in the demo config);
    # generalize the fused kernel for arbitrary len(hidden_sizes).
    assert len(hidden_sizes) == 2, "fused kernel is specialized to 2 hidden layers"
    sizes = [obs_dim] + list(hidden_sizes) + [1]
    params = {}
    for j in range(len(sizes) - 1):
        fan_in, fan_out = sizes[j], sizes[j + 1]
        key, kw, kb = jax.random.split(key, 3)
        bound = 1.0 / (fan_in ** 0.5)
        w = jax.random.uniform(kw, (fan_in, fan_out), jnp.float32, -bound, bound)
        b = jax.random.uniform(kb, (1, fan_out), jnp.float32, -bound, bound)
        if j == len(sizes) - 2:
            params["W3r"] = w.T.astype(param_dtype)   # (1, H2) row
            params["b3"] = b                          # (1, 1) f32
        else:
            params[f"W{j + 1}"] = w.astype(param_dtype)
            params[f"b{j + 1}"] = b
    return params


def reference_forward(obs, params):
    """Pure-JAX reference with the same bf16-at-MXU-boundary casts as the kernel."""
    dt = params["W1"].dtype
    x = obs.astype(dt)
    h = jnp.tanh(jnp.dot(x, params["W1"], preferred_element_type=jnp.float32) + params["b1"])
    h = jnp.tanh(jnp.dot(h.astype(dt), params["W2"],
                         preferred_element_type=jnp.float32) + params["b2"])
    v = jnp.dot(h.astype(dt), params["W3r"].T,
                preferred_element_type=jnp.float32) + params["b3"]
    return jnp.squeeze(v, axis=-1)


if __name__ == "__main__":
    key = jax.random.PRNGKey(0)
    obs_dim, hidden_sizes = 16, (32, 32)
    B = 300  # not a tile multiple -> exercises padding + multi-tile grid

    key, k_obs = jax.random.split(key)
    obs = jax.random.normal(k_obs, (B, obs_dim), jnp.float32)
    params = init_params(key, obs_dim, hidden_sizes, param_dtype=jnp.bfloat16)

    # Small tile here to exercise several grid steps; production default is 1024.
    v = jax.block_until_ready(mlp_critic_forward(obs, params, tile_b=128))
    v_ref = jax.block_until_ready(reference_forward(obs, params))

    assert v.shape == (B,), v.shape
    assert jnp.allclose(v, v_ref, atol=1e-3, rtol=1e-3), (v, v_ref)
    print("KERNEL_OK")
</pallas_src>

<mosaic_0001>
module attributes {stable_mosaic.version = 11 : i64} {
  func.func @_critic_kernel(%arg0: i32, %arg1: memref<128x16xbf16, #tpu.memory_space<vmem>>, %arg2: memref<16x32xbf16, #tpu.memory_space<vmem>>, %arg3: memref<1x32xf32, #tpu.memory_space<vmem>>, %arg4: memref<32x32xbf16, #tpu.memory_space<vmem>>, %arg5: memref<1x32xf32, #tpu.memory_space<vmem>>, %arg6: memref<1x32xbf16, #tpu.memory_space<vmem>>, %arg7: memref<1x1xf32, #tpu.memory_space<vmem>>, %arg8: memref<1x128xf32, #tpu.memory_space<vmem>>) attributes {dimension_semantics = [#tpu.dimension_semantics<parallel>], iteration_bounds = array<i64: 3>, scalar_prefetch = 0 : i64, scratch_operands = 0 : i64, tpu.core_type = #tpu.core_type<tc>, window_params = [{transform_indices = @transform_0, window_bounds = array<i64: 128, 16>}, {pipeline_mode = #tpu.pipeline_mode<synchronous>, transform_indices = @transform_1, window_bounds = array<i64: 16, 32>}, {pipeline_mode = #tpu.pipeline_mode<synchronous>, transform_indices = @transform_2, window_bounds = array<i64: 1, 32>}, {pipeline_mode = #tpu.pipeline_mode<synchronous>, transform_indices = @transform_3, window_bounds = array<i64: 32, 32>}, {pipeline_mode = #tpu.pipeline_mode<synchronous>, transform_indices = @transform_4, window_bounds = array<i64: 1, 32>}, {pipeline_mode = #tpu.pipeline_mode<synchronous>, transform_indices = @transform_5, window_bounds = array<i64: 1, 32>}, {pipeline_mode = #tpu.pipeline_mode<synchronous>, transform_indices = @transform_6, window_bounds = array<i64: 1, 1>}, {transform_indices = @transform_7, window_bounds = array<i64: 1, 128>}]} {
    %c0 = arith.constant 0 : index
    %c0_0 = arith.constant 0 : index
    %0 = vector.load %arg1[%c0, %c0_0] : memref<128x16xbf16, #tpu.memory_space<vmem>>, vector<128x16xbf16>
    %c0_1 = arith.constant 0 : index
    %c0_2 = arith.constant 0 : index
    %1 = vector.load %arg2[%c0_1, %c0_2] : memref<16x32xbf16, #tpu.memory_space<vmem>>, vector<16x32xbf16>
    %cst = arith.constant dense<0.000000e+00> : vector<128x32xf32>
    %2 = tpu.matmul %0, %1, %cst {dimension_numbers = #tpu.dot_dimension_numbers<[1], [0], [0], [1], [0, 0, 1, 1], [], []>} : vector<128x16xbf16>, vector<16x32xbf16>, vector<128x32xf32> -> vector<128x32xf32>
    %c0_3 = arith.constant 0 : index
    %c0_4 = arith.constant 0 : index
    %3 = vector.load %arg3[%c0_3, %c0_4] : memref<1x32xf32, #tpu.memory_space<vmem>>, vector<1x32xf32>
    %4 = vector.broadcast %3 : vector<1x32xf32> to vector<128x32xf32>
    %5 = arith.addf %2, %4 : vector<128x32xf32>
    %6 = math.tanh %5 : vector<128x32xf32>
    %7 = arith.truncf %6 : vector<128x32xf32> to vector<128x32xbf16>
    %c0_5 = arith.constant 0 : index
    %c0_6 = arith.constant 0 : index
    %8 = vector.load %arg4[%c0_5, %c0_6] : memref<32x32xbf16, #tpu.memory_space<vmem>>, vector<32x32xbf16>
    %cst_7 = arith.constant dense<0.000000e+00> : vector<128x32xf32>
    %9 = tpu.matmul %7, %8, %cst_7 {dimension_numbers = #tpu.dot_dimension_numbers<[1], [0], [0], [1], [0, 0, 1, 1], [], []>} : vector<128x32xbf16>, vector<32x32xbf16>, vector<128x32xf32> -> vector<128x32xf32>
    %c0_8 = arith.constant 0 : index
    %c0_9 = arith.constant 0 : index
    %10 = vector.load %arg5[%c0_8, %c0_9] : memref<1x32xf32, #tpu.memory_space<vmem>>, vector<1x32xf32>
    %11 = vector.broadcast %10 : vector<1x32xf32> to vector<128x32xf32>
    %12 = arith.addf %9, %11 : vector<128x32xf32>
    %13 = math.tanh %12 : vector<128x32xf32>
    %c0_10 = arith.constant 0 : index
    %c0_11 = arith.constant 0 : index
    %14 = vector.load %arg6[%c0_10, %c0_11] : memref<1x32xbf16, #tpu.memory_space<vmem>>, vector<1x32xbf16>
    %15 = arith.truncf %13 : vector<128x32xf32> to vector<128x32xbf16>
    %cst_12 = arith.constant dense<0.000000e+00> : vector<1x128xf32>
    %16 = tpu.matmul %14, %15, %cst_12 {dimension_numbers = #tpu.dot_dimension_numbers<[1], [1], [0], [0], [0, 0, 1, 0], [], []>} : vector<1x32xbf16>, vector<128x32xbf16>, vector<1x128xf32> -> vector<1x128xf32>
    %c0_13 = arith.constant 0 : index
    %c0_14 = arith.constant 0 : index
    %17 = vector.load %arg7[%c0_13, %c0_14] : memref<1x1xf32, #tpu.memory_space<vmem>>, vector<1x1xf32>
    %18 = vector.broadcast %17 : vector<1x1xf32> to vector<1x128xf32>
    %19 = arith.addf %16, %18 : vector<1x128xf32>
    %c0_15 = arith.constant 0 : index
    %c0_16 = arith.constant 0 : index
    %20 = vector.load %arg8[%c0_15, %c0_16] : memref<1x128xf32, #tpu.memory_space<vmem>>, vector<1x128xf32>
    tpu.vector_store %arg8[%c0_15, %c0_16], %19 {strides = array<i32>} : memref<1x128xf32, #tpu.memory_space<vmem>>, vector<1x128xf32>,
    return
  }
  func.func @transform_0(%arg0: i32) -> (i32, i32) {
    %c0_i32 = arith.constant 0 : i32
    %c0_i32_0 = arith.constant 0 : i32
    return %arg0, %c0_i32 : i32, i32
  }
  func.func @transform_1(%arg0: i32) -> (i32, i32) {
    %c0_i32 = arith.constant 0 : i32
    %c0_i32_0 = arith.constant 0 : i32
    %c0_i32_1 = arith.constant 0 : i32
    return %c0_i32, %c0_i32_0 : i32, i32
  }
  func.func @transform_2(%arg0: i32) -> (i32, i32) {
    %c0_i32 = arith.constant 0 : i32
    %c0_i32_0 = arith.constant 0 : i32
    %c0_i32_1 = arith.constant 0 : i32
    return %c0_i32, %c0_i32_0 : i32, i32
  }
  func.func @transform_3(%arg0: i32) -> (i32, i32) {
    %c0_i32 = arith.constant 0 : i32
    %c0_i32_0 = arith.constant 0 : i32
    %c0_i32_1 = arith.constant 0 : i32
    return %c0_i32, %c0_i32_0 : i32, i32
  }
  func.func @transform_4(%arg0: i32) -> (i32, i32) {
    %c0_i32 = arith.constant 0 : i32
    %c0_i32_0 = arith.constant 0 : i32
    %c0_i32_1 = arith.constant 0 : i32
    return %c0_i32, %c0_i32_0 : i32, i32
  }
  func.func @transform_5(%arg0: i32) -> (i32, i32) {
    %c0_i32 = arith.constant 0 : i32
    %c0_i32_0 = arith.constant 0 : i32
    %c0_i32_1 = arith.constant 0 : i32
    return %c0_i32, %c0_i32_0 : i32, i32
  }
  func.func @transform_6(%arg0: i32) -> (i32, i32) {
    %c0_i32 = arith.constant 0 : i32
    %c0_i32_0 = arith.constant 0 : i32
    %c0_i32_1 = arith.constant 0 : i32
    return %c0_i32, %c0_i32_0 : i32, i32
  }
  func.func @transform_7(%arg0: i32) -> (i32, i32) {
    %c0_i32 = arith.constant 0 : i32
    %c0_i32_0 = arith.constant 0 : i32
    return %c0_i32, %arg0 : i32, i32
  }
}

</mosaic_0001>

<llo_original>
// kernel: tpu_custom_call.1
$region0: #{tpu_custom_call.1}
  #allocation0 [shape = 'u32[]', space=smem, size = 0x4, offset = 0x4, fixed_abs, tag = 'smem constant byte address 0x4 - core index']
  #allocation1 [shape = 'u32[144,128]{1,0:T(1,128)}', space=vmem, size = 0x12000, scoped, tag = 'internal scratch']
  #allocation2 [shape = 'f32[1,1]{1,0:T(1,128)S(1)}', space=vmem, size = 0x200, scoped, tag = 'scoped memory for tpu_custom_call.1']
  %s0 = inlined_call_operand.vmem [shape: bf16[384,16], index: 0, kind: input, shape index: {}]
  %s1 = inlined_call_operand.vmem [shape: bf16[16,32], index: 1, kind: input, shape index: {}]
  %s2 = inlined_call_operand.vmem [shape: f32[1,32], index: 2, kind: input, shape index: {}]
  %s3 = inlined_call_operand.vmem [shape: bf16[32,32], index: 3, kind: input, shape index: {}]
  %s4 = inlined_call_operand.vmem [shape: f32[1,32], index: 4, kind: input, shape index: {}]
  %s5 = inlined_call_operand.vmem [shape: bf16[1,32], index: 5, kind: input, shape index: {}]
  %s6 = inlined_call_operand.<no memory space> [shape: f32[1,1], index: 6, kind: input, shape index: {}]
  %s7 = inlined_call_operand.hbm [shape: f32[1,384], index: 7, kind: output, shape index: {}]
  %s8 = sld [smem:[#allocation0]]
  $region61: #{tpu_custom_call.1} parent=0
    _
  %s10 = ssub.s32 1, %s8
  %s11 = scalar_select 0, %s10, %s8
  %v12 = vstv %s6
  %13 = vst [vmem:[#allocation2] sm:$0x1] %v12
  $region1: #{tpu_custom_call.1} parent=0
    #allocation3 [shape = 'u8[1024]{0}', space=vmem, size = 0x400, scoped, tag = 'output window, operand 0']
    #allocation4 [shape = 's32[2]{0}', space=sflag, size = 0x8, scoped, tag = 'scoped memory for tpu_custom_call.1']
    %14 = vsyncpa [#allocation4], 0
    %s15 = scalar_lea.sflag [#allocation4], 1
    %16 = vsyncpa %s15, 0
    loop: start=0, step=1, limit=5
    $region2: #{tpu_custom_call.1} parent=1 // loop_pre_header
      _
    $region3: #{tpu_custom_call.1} parent=1 // loop_header
      %s18 = sphi 0, %s22
      %p19 = scmp.ge.s32.totalorder %s18, 5
      %s28 = sphi 0, %s30
      %s31 = sphi 0, %s28
      %s32 = sphi 0, %s31
      %s48 = sphi 0, %s32
      %s52 = sphi 0, %s52
      %s54 = sphi 0, %s52
      %s55 = sphi 0, %s54
      %s69 = sphi 0, %s55
      %s73 = sphi 0, %s73
      %s75 = sphi 0, %s73
      %s76 = sphi 0, %s75
      %s90 = sphi 0, %s76
      %s94 = sphi 0, %s94
      %s96 = sphi 0, %s94
      %s97 = sphi 0, %s96
      %s111 = sphi 0, %s97
      %s115 = sphi 0, %s115
      %s117 = sphi 0, %s115
      %s118 = sphi 0, %s117
      %s132 = sphi 0, %s118
      %s136 = sphi 0, %s136
      %s138 = sphi 0, %s136
      %s139 = sphi 0, %s138
      %s153 = sphi 0, %s139
      %s157 = sphi 0, %s157
      %s159 = sphi 0, %s157
      %s160 = sphi 0, %s159
      %s174 = sphi 0, %s160
      %s180 = sphi 0, %s182
      %s183 = sphi 0, %s180
      %s184 = sphi 0, %s183
      %s200 = sphi 0, %s184
    $region4: #{tpu_custom_call.1} parent=1 // loop_header_branch
      %21 = sbr.rel (%p19) target = $region8
    $region5: #{tpu_custom_call.1} parent=1 // loop_body
      %s23 = ssub.s32 %s18, 1
      %s24 = ssub.s32 %s18, 2
      %s25 = sadd.s32 %s18, 1
      %s26 = ssub.s32 %s18, %s25
      %p27 = scmp.eq.s32.totalorder %s26, 0
      %s29 = sadd.s32 %s28, 1
      %s30 = scalar_select %p27, %s28, %s29
      %p33 = pneg %p27
      %p34 = scmp.eq.s32.totalorder %s18, 2
      %p35 = por %p33, %p34
      %p36 = scmp.ne.s32.totalorder %s28, %s31
      %p37 = scmp.eq.s32.totalorder %s18, 0
      %p38 = por %p36, %p37
      %p39 = scmp.ne.s32.totalorder %s28, %s31
      %p40 = scmp.eq.s32.totalorder %s23, 2
      %p41 = por %p39, %p40
      %p42 = scmp.ne.s32.totalorder %s31, %s32
      %p43 = scmp.eq.s32.totalorder %s23, 0
      %p44 = por %p42, %p43
      %p45 = scmp.ne.s32.totalorder %s31, %s32
      %p46 = scmp.eq.s32.totalorder %s24, 2
      %p47 = por %p45, %p46
      %p49 = scmp.ne.s32.totalorder %s32, %s48
      %p50 = scmp.eq.s32.totalorder %s24, 0
      %p51 = por %p49, %p50
      %s53 = sadd.s32 %s52, 1
      %p56 = scmp.eq.s32.totalorder %s18, 2
      %p57 = scmp.ne.s32.totalorder %s52, %s54
      %p58 = scmp.eq.s32.totalorder %s18, 0
      %p59 = por %p57, %p58
      %p60 = scmp.ne.s32.totalorder %s52, %s54
      %p61 = scmp.eq.s32.totalorder %s23, 2
      %p62 = por %p60, %p61
      %p63 = scmp.ne.s32.totalorder %s54, %s55
      %p64 = scmp.eq.s32.totalorder %s23, 0
      %p65 = por %p63, %p64
      %p66 = scmp.ne.s32.totalorder %s54, %s55
      %p67 = scmp.eq.s32.totalorder %s24, 2
      %p68 = por %p66, %p67
      %p70 = scmp.ne.s32.totalorder %s55, %s69
      %p71 = scmp.eq.s32.totalorder %s24, 0
      %p72 = por %p70, %p71
      %s74 = sadd.s32 %s73, 1
      %p77 = scmp.eq.s32.totalorder %s18, 2
      %p78 = scmp.ne.s32.totalorder %s73, %s75
      %p79 = scmp.eq.s32.totalorder %s18, 0
      %p80 = por %p78, %p79
      %p81 = scmp.ne.s32.totalorder %s73, %s75
      %p82 = scmp.eq.s32.totalorder %s23, 2
      %p83 = por %p81, %p82
      %p84 = scmp.ne.s32.totalorder %s75, %s76
      %p85 = scmp.eq.s32.totalorder %s23, 0
      %p86 = por %p84, %p85
      %p87 = scmp.ne.s32.totalorder %s75, %s76
      %p88 = scmp.eq.s32.totalorder %s24, 2
      %p89 = por %p87, %p88
      %p91 = scmp.ne.s32.totalorder %s76, %s90
      %p92 = scmp.eq.s32.totalorder %s24, 0
      %p93 = por %p91, %p92
      %s95 = sadd.s32 %s94, 1
      %p98 = scmp.eq.s32.totalorder %s18, 2
      %p99 = scmp.ne.s32.totalorder %s94, %s96
      %p100 = scmp.eq.s32.totalorder %s18, 0
      %p101 = por %p99, %p100
      %p102 = scmp.ne.s32.totalorder %s94, %s96
      %p103 = scmp.eq.s32.totalorder %s23, 2
      %p104 = por %p102, %p103
      %p105 = scmp.ne.s32.totalorder %s96, %s97
      %p106 = scmp.eq.s32.totalorder %s23, 0
      %p107 = por %p105, %p106
      %p108 = scmp.ne.s32.totalorder %s96, %s97
      %p109 = scmp.eq.s32.totalorder %s24, 2
      %p110 = por %p108, %p109
      %p112 = scmp.ne.s32.totalorder %s97, %s111
      %p113 = scmp.eq.s32.totalorder %s24, 0
      %p114 = por %p112, %p113
      %s116 = sadd.s32 %s115, 1
      %p119 = scmp.eq.s32.totalorder %s18, 2
      %p120 = scmp.ne.s32.totalorder %s115, %s117
      %p121 = scmp.eq.s32.totalorder %s18, 0
      %p122 = por %p120, %p121
      %p123 = scmp.ne.s32.totalorder %s115, %s117
      %p124 = scmp.eq.s32.totalorder %s23, 2
      %p125 = por %p123, %p124
      %p126 = scmp.ne.s32.totalorder %s117, %s118
      %p127 = scmp.eq.s32.totalorder %s23, 0
      %p128 = por %p126, %p127
      %p129 = scmp.ne.s32.totalorder %s117, %s118
      %p130 = scmp.eq.s32.totalorder %s24, 2
      %p131 = por %p129, %p130
      %p133 = scmp.ne.s32.totalorder %s118, %s132
      %p134 = scmp.eq.s32.totalorder %s24, 0
      %p135 = por %p133, %p134
      %s137 = sadd.s32 %s136, 1
      %p140 = scmp.eq.s32.totalorder %s18, 2
      %p141 = scmp.ne.s32.totalorder %s136, %s138
      %p142 = scmp.eq.s32.totalorder %s18, 0
      %p143 = por %p141, %p142
      %p144 = scmp.ne.s32.totalorder %s136, %s138
      %p145 = scmp.eq.s32.totalorder %s23, 2
      %p146 = por %p144, %p145
      %p147 = scmp.ne.s32.totalorder %s138, %s139
      %p148 = scmp.eq.s32.totalorder %s23, 0
      %p149 = por %p147, %p148
      %p150 = scmp.ne.s32.totalorder %s138, %s139
      %p151 = scmp.eq.s32.totalorder %s24, 2
      %p152 = por %p150, %p151
      %p154 = scmp.ne.s32.totalorder %s139, %s153
      %p155 = scmp.eq.s32.totalorder %s24, 0
      %p156 = por %p154, %p155
      %s158 = sadd.s32 %s157, 1
      %p161 = scmp.eq.s32.totalorder %s18, 2
      %p162 = scmp.ne.s32.totalorder %s157, %s159
      %p163 = scmp.eq.s32.totalorder %s18, 0
      %p164 = por %p162, %p163
      %p165 = scmp.ne.s32.totalorder %s157, %s159
      %p166 = scmp.eq.s32.totalorder %s23, 2
      %p167 = por %p165, %p166
      %p168 = scmp.ne.s32.totalorder %s159, %s160
      %p169 = scmp.eq.s32.totalorder %s23, 0
      %p170 = por %p168, %p169
      %p171 = scmp.ne.s32.totalorder %s159, %s160
      %p172 = scmp.eq.s32.totalorder %s24, 2
      %p173 = por %p171, %p172
      %p175 = scmp.ne.s32.totalorder %s160, %s174
      %p176 = scmp.eq.s32.totalorder %s24, 0
      %p177 = por %p175, %p176
      %s178 = ssub.s32 %s18, %s25
      %p179 = scmp.eq.s32.totalorder %s178, 0
      %s181 = sadd.s32 %s180, 1
      %s182 = scalar_select %p179, %s180, %s181
      %p185 = pneg %p179
      %p186 = scmp.eq.s32.totalorder %s18, 2
      %p187 = por %p185, %p186
      %p188 = scmp.ne.s32.totalorder %s180, %s183
      %p189 = scmp.eq.s32.totalorder %s18, 0
      %p190 = por %p188, %p189
      %p191 = scmp.ne.s32.totalorder %s180, %s183
      %p192 = scmp.eq.s32.totalorder %s23, 2
      %p193 = por %p191, %p192
      %p194 = scmp.ne.s32.totalorder %s183, %s184
      %p195 = scmp.eq.s32.totalorder %s23, 0
      %p196 = por %p194, %p195
      %p197 = scmp.ne.s32.totalorder %s183, %s184
      %p198 = scmp.eq.s32.totalorder %s24, 2
      %p199 = por %p197, %p198
      %p201 = scmp.ne.s32.totalorder %s184, %s200
      %p202 = scmp.eq.s32.totalorder %s24, 0
      %p203 = por %p201, %p202
      %p204 = scmp.le.s32.totalorder 1, %s18
      %p205 = scmp.lt.s32.totalorder %s18, 4
      %p206 = pnand %p204, %p205
      %p207 = pneg %p206
      // Predicated region
      $region9: #{tpu_custom_call.1} parent=5 // pred_check
        _
      $region10: #{tpu_custom_call.1} parent=5 // pred_check_branch
        %209 = sbr.rel (%p206) target = $region12
      $region11: #{tpu_custom_call.1} parent=5 // pred_region
        %s210 = ssub.s32 %s18, 1
        // Predicated region
        $region13: #{tpu_custom_call.1} parent=11 // pred_check
          %p211 = pneg %p65
        $region14: #{tpu_custom_call.1} parent=11 // pred_check_branch
          %213 = sbr.rel (%p211) target = $region16
        $region15: #{tpu_custom_call.1} parent=11 // pred_region
          _
        $region16: #{tpu_custom_call.1} parent=11 // pred_fallthru
          _
        // Predicated region
        $region17: #{tpu_custom_call.1} parent=11 // pred_check
          %p214 = pneg %p86
        $region18: #{tpu_custom_call.1} parent=11 // pred_check_branch
          %216 = sbr.rel (%p214) target = $region20
        $region19: #{tpu_custom_call.1} parent=11 // pred_region
          _
        $region20: #{tpu_custom_call.1} parent=11 // pred_fallthru
          _
        // Predicated region
        $region21: #{tpu_custom_call.1} parent=11 // pred_check
          %p217 = pneg %p107
        $region22: #{tpu_custom_call.1} parent=11 // pred_check_branch
          %219 = sbr.rel (%p217) target = $region24
        $region23: #{tpu_custom_call.1} parent=11 // pred_region
          _
        $region24: #{tpu_custom_call.1} parent=11 // pred_fallthru
          _
        // Predicated region
        $region25: #{tpu_custom_call.1} parent=11 // pred_check
          %p220 = pneg %p128
        $region26: #{tpu_custom_call.1} parent=11 // pred_check_branch
          %222 = sbr.rel (%p220) target = $region28
        $region27: #{tpu_custom_call.1} parent=11 // pred_region
          _
        $region28: #{tpu_custom_call.1} parent=11 // pred_fallthru
          _
        // Predicated region
        $region29: #{tpu_custom_call.1} parent=11 // pred_check
          %p223 = pneg %p149
        $region30: #{tpu_custom_call.1} parent=11 // pred_check_branch
          %225 = sbr.rel (%p223) target = $region32
        $region31: #{tpu_custom_call.1} parent=11 // pred_region
          _
        $region32: #{tpu_custom_call.1} parent=11 // pred_fallthru
          _
        // Predicated region
        $region33: #{tpu_custom_call.1} parent=11 // pred_check
          %p226 = pneg %p170
        $region34: #{tpu_custom_call.1} parent=11 // pred_check_branch
          %228 = sbr.rel (%p226) target = $region36
        $region35: #{tpu_custom_call.1} parent=11 // pred_region
          _
        $region36: #{tpu_custom_call.1} parent=11 // pred_fallthru
          _
      $region12: #{tpu_custom_call.1} parent=5 // pred_fallthru
        _
      %p229 = scmp.lt.s32.totalorder %s18, 3
      // Predicated region
      $region37: #{tpu_custom_call.1} parent=5 // pred_check
        %p230 = pneg %p229
      $region38: #{tpu_custom_call.1} parent=5 // pred_check_branch
        %232 = sbr.rel (%p230) target = $region40
      $region39: #{tpu_custom_call.1} parent=5 // pred_region
        // Predicated region
        $region41: #{tpu_custom_call.1} parent=39 // pred_check
          %p233 = pneg %p38
        $region42: #{tpu_custom_call.1} parent=39 // pred_check_branch
          %235 = sbr.rel (%p233) target = $region44
        $region43: #{tpu_custom_call.1} parent=39 // pred_region
          %s236 = smul.u32 16, %s18
          %p237 = scmp.lt.s32.totalorder %s236, 47
          %s238 = scalar_select %p237, %s236, 47
          %s239 = smul.addr %s238, 4
          %s240 = scalar_lea.vmem %s0, %s239
          %s241 = smul.u32 16, %s18
        $region44: #{tpu_custom_call.1} parent=39 // pred_fallthru
          _
      $region40: #{tpu_custom_call.1} parent=5 // pred_fallthru
        _
      %p242 = scmp.le.s32.totalorder 1, %s18
      %p243 = scmp.lt.s32.totalorder %s18, 4
      %p244 = pnand %p242, %p243
      %p245 = pneg %p244
      // Predicated region
      $region45: #{tpu_custom_call.1} parent=5 // pred_check
        _
      $region46: #{tpu_custom_call.1} parent=5 // pred_check_branch
        %247 = sbr.rel (%p244) target = $region48
      $region47: #{tpu_custom_call.1} parent=5 // pred_region
        %s248 = ssub.s32 %s18, 1
        %s249 = smul.u32 16, %s23
        %p250 = scmp.lt.s32.totalorder %s249, 47
        %s251 = scalar_select %p250, %s249, 47
        %s252 = smul.addr %s251, 4
        %s253 = scalar_lea.vmem %s0, %s252
        %p254 = pneg %p44
        %p255 = pneg %p41
        %p256 = pneg %p65
        %p257 = pneg %p62
        %p258 = pneg %p86
        %p259 = pneg %p83
        %p260 = pneg %p107
        %p261 = pneg %p104
        %p262 = pneg %p128
        %p263 = pneg %p125
        %p264 = pneg %p149
        %p265 = pneg %p146
        %p266 = pneg %p170
        %p267 = pneg %p167
        %p268 = pneg %p196
        %p269 = pneg %p193
        %s270 = sand.u32 %s183, 1
        %s271 = scalar_lea.sflag [#allocation4], %s270
        %s272 = sand.u32 %s183, 1
        %s273 = scalar_lea.vmem [#allocation3], %s272
        %s274 = smul.u32 16, %s23
        %p275 = scmp.lt.s32.totalorder %s274, 47
        %s276 = scalar_select %p275, %s274, 47
        %s277 = smul.addr %s276, 4
        %s278 = scalar_lea.vmem %s0, %s277
        %s279 = smul.u32 16, %s23
        %v281 = vld [vmem:[%s278] sm:$0xf]
        %v282 = vld [vmem:[%s278 + $0x4] sm:$0xf]
        %v283 = vld [vmem:[%s278 + $0x8] sm:$0xf]
        %v284 = vld [vmem:[%s278 + $0xc] sm:$0xf]
        %v285 = vld [vmem:[%s278 + $0x10] sm:$0xf]
        %v286 = vld [vmem:[%s278 + $0x14] sm:$0xf]
        %v287 = vld [vmem:[%s278 + $0x18] sm:$0xf]
        %v288 = vld [vmem:[%s278 + $0x1c] sm:$0xf]
        %v289 = vld [vmem:[%s278 + $0x20] sm:$0xf]
        %v290 = vld [vmem:[%s278 + $0x24] sm:$0xf]
        %v291 = vld [vmem:[%s278 + $0x28] sm:$0xf]
        %v292 = vld [vmem:[%s278 + $0x2c] sm:$0xf]
        %v293 = vld [vmem:[%s278 + $0x30] sm:$0xf]
        %v294 = vld [vmem:[%s278 + $0x34] sm:$0xf]
        %v295 = vld [vmem:[%s278 + $0x38] sm:$0xf]
        %v296 = vld [vmem:[%s278 + $0x3c] sm:$0xf]
        %v297 = vld [vmem:[%s1] sm:$0xf]
        %v298 = vld [vmem:[%s1 + $0x4] sm:$0xf]
        %v299 = vld [vmem:[%s2] sm:$0x1]
        %v301 = vlaneseq
        %v302 = vshrl.u32 %v301, 7
        %v303 = vsub.s32 0, %v302
        %v304 = vrot.slane %v299, %v303
        %v322 = vunpack.c.l.b16 %v281
        %v323 = vunpack.c.l.b16 %v282
        %v324 = vunpack.c.l.b16 %v283
        %v325 = vunpack.c.l.b16 %v284
        %v326 = vunpack.c.l.b16 %v285
        %v327 = vunpack.c.l.b16 %v286
        %v328 = vunpack.c.l.b16 %v287
        %v329 = vunpack.c.l.b16 %v288
        %v330 = vunpack.c.l.b16 %v289
        %v331 = vunpack.c.l.b16 %v290
        %v332 = vunpack.c.l.b16 %v291
        %v333 = vunpack.c.l.b16 %v292
        %v334 = vunpack.c.l.b16 %v293
        %v335 = vunpack.c.l.b16 %v294
        %v336 = vunpack.c.l.b16 %v295
        %v337 = vunpack.c.l.b16 %v296
        %v338 = vpack.c.b16 %v323, %v322
        %v339 = vpack.c.b16 %v325, %v324
        %v340 = vpack.c.b16 %v327, %v326
        %v341 = vpack.c.b16 %v329, %v328
        %v342 = vpack.c.b16 %v331, %v330
        %v343 = vpack.c.b16 %v333, %v332
        %v344 = vpack.c.b16 %v335, %v334
        %v345 = vpack.c.b16 %v337, %v336
        %v348 = vunpack.c.l.b16 %v297
        %v349 = vunpack.c.l.b16 %v298
        %v350 = vpack.c.b16 %v349, %v348
        %vm352 = vcmask 130048
        %v354 = vsel %vm352, %v338, 0
        %v357 = vsel %vm352, %v339, 0
        %v360 = vsel %vm352, %v340, 0
        %v363 = vsel %vm352, %v341, 0
        %v366 = vsel %vm352, %v342, 0
        %v369 = vsel %vm352, %v343, 0
        %v372 = vsel %vm352, %v344, 0
        %v375 = vsel %vm352, %v345, 0
        %377 = vmatprep.subr.bf16.mxu0 0
        %378 = vmatpush1.bf16.msra.mxu0 %v350
        %379 = vmatprep.subr.bf16.mxu0 0
        %380 = vmatpush1.bf16.msra.mxu0 0
        %381 = vmatprep.subr.bf16.mxu0 0
        %382 = vmatpush1.bf16.msra.mxu0 0
        %383 = vmatprep.subr.bf16.mxu0 0
        %384 = vmatpush1.bf16.msra.mxu0 0
        %385 = vmatprep.subr.bf16.mxu0 0
        %386 = vmatpush1.bf16.msra.mxu0 0
        %387 = vmatprep.subr.bf16.mxu0 0
        %388 = vmatpush1.bf16.msra.mxu0 0
        %389 = vmatprep.subr.bf16.mxu0 0
        %390 = vmatpush1.bf16.msra.mxu0 0
        %391 = vmatprep.subr.bf16.mxu0 0
        %392 = vmatpush1.bf16.msra.mxu0 0
        %393 = vmatprep.subr.bf16.mxu0 0
        %394 = vmatpush1.bf16.msra.mxu0 0
        %395 = vmatprep.subr.bf16.mxu0 0
        %396 = vmatpush1.bf16.msra.mxu0 0
        %397 = vmatprep.subr.bf16.mxu0 0
        %398 = vmatpush1.bf16.msra.mxu0 0
        %399 = vmatprep.subr.bf16.mxu0 0
        %400 = vmatpush1.bf16.msra.mxu0 0
        %401 = vmatprep.subr.bf16.mxu0 0
        %402 = vmatpush1.bf16.msra.mxu0 0
        %403 = vmatprep.subr.bf16.mxu0 0
        %404 = vmatpush1.bf16.msra.mxu0 0
        %405 = vmatprep.subr.bf16.mxu0 0
        %406 = vmatpush1.bf16.msra.mxu0 0
        %407 = vmatprep.subr.bf16.mxu0 0
        %408 = vmatpush1.bf16.msra.mxu0 0
        %409 = vmatprep.mubr.bf16.mxu0 0
        %410 = vmatmul.mubr.bf16.gmra.mrb[0].mxu0 %v354
        %v411 = vpop.f32.mrb[0].mxu0
        %v412 = vadd.f32 %v304, %v411
        %v413 = vpop.f32.mrb[0].mxu0
        %v414 = vpop.f32.mrb[0].mxu0
        %v415 = vadd.f32 %v304, %v414
        %v416 = vpop.f32.mrb[0].mxu0
        %417 = vmatprep.mubr.bf16.mxu0 0
        %418 = vmatmul.mubr.bf16.gmra.mrb[0].mxu0 %v357
        %v419 = vpop.f32.mrb[0].mxu0
        %v420 = vadd.f32 %v304, %v419
        %v421 = vpop.f32.mrb[0].mxu0
        %v422 = vpop.f32.mrb[0].mxu0
        %v423 = vadd.f32 %v304, %v422
        %v424 = vpop.f32.mrb[0].mxu0
        %425 = vmatprep.mubr.bf16.mxu0 0
        %426 = vmatmul.mubr.bf16.gmra.mrb[0].mxu0 %v360
        %v427 = vpop.f32.mrb[0].mxu0
        %v428 = vadd.f32 %v304, %v427
        %v429 = vpop.f32.mrb[0].mxu0
        %v430 = vpop.f32.mrb[0].mxu0
        %v431 = vadd.f32 %v304, %v430
        %v432 = vpop.f32.mrb[0].mxu0
        %433 = vmatprep.mubr.bf16.mxu0 0
        %434 = vmatmul.mubr.bf16.gmra.mrb[0].mxu0 %v363
        %v435 = vpop.f32.mrb[0].mxu0
        %v436 = vadd.f32 %v304, %v435
        %v437 = vpop.f32.mrb[0].mxu0
        %v438 = vpop.f32.mrb[0].mxu0
        %v439 = vadd.f32 %v304, %v438
        %v440 = vpop.f32.mrb[0].mxu0
        %441 = vmatprep.mubr.bf16.mxu0 0
        %442 = vmatmul.mubr.bf16.gmra.mrb[0].mxu0 %v366
        %v443 = vpop.f32.mrb[0].mxu0
        %v444 = vadd.f32 %v304, %v443
        %v445 = vpop.f32.mrb[0].mxu0
        %v446 = vpop.f32.mrb[0].mxu0
        %v447 = vadd.f32 %v304, %v446
        %v448 = vpop.f32.mrb[0].mxu0
        %449 = vmatprep.mubr.bf16.mxu0 0
        %450 = vmatmul.mubr.bf16.gmra.mrb[0].mxu0 %v369
        %v451 = vpop.f32.mrb[0].mxu0
        %v452 = vadd.f32 %v304, %v451
        %v453 = vpop.f32.mrb[0].mxu0
        %v454 = vpop.f32.mrb[0].mxu0
        %v455 = vadd.f32 %v304, %v454
        %v456 = vpop.f32.mrb[0].mxu0
        %457 = vmatprep.mubr.bf16.mxu0 0
        %458 = vmatmul.mubr.bf16.gmra.mrb[0].mxu0 %v372
        %v459 = vpop.f32.mrb[0].mxu0
        %v460 = vadd.f32 %v304, %v459
        %v461 = vpop.f32.mrb[0].mxu0
        %v462 = vpop.f32.mrb[0].mxu0
        %v463 = vadd.f32 %v304, %v462
        %v464 = vpop.f32.mrb[0].mxu0
        %465 = vmatprep.mubr.bf16.mxu0 0
        %466 = vmatmul.mubr.bf16.gmra.mrb[0].mxu0 %v375
        %v467 = vpop.f32.mrb[0].mxu0
        %v468 = vadd.f32 %v304, %v467
        %v469 = vpop.f32.mrb[0].mxu0
        %v470 = vpop.f32.mrb[0].mxu0
        %v471 = vadd.f32 %v304, %v470
        %v472 = vpop.f32.mrb[0].mxu0
        %473 = vdwg.mxu0
        %v474 = vtanh.pop %v412
        %v475 = vtanh.pop %v415
        %v476 = vtanh.pop %v420
        %v477 = vtanh.pop %v423
        %v478 = vtanh.pop %v428
        %v479 = vtanh.pop %v431
        %v480 = vtanh.pop %v436
        %v481 = vtanh.pop %v439
        %v482 = vtanh.pop %v444
        %v483 = vtanh.pop %v447
        %v484 = vtanh.pop %v452
        %v485 = vtanh.pop %v455
        %v486 = vtanh.pop %v460
        %v487 = vtanh.pop %v463
        %v488 = vtanh.pop %v468
        %v489 = vtanh.pop %v471
        %v490 = vpack.c.bf16 %v475, %v474
        %v491 = vpack.c.bf16 %v477, %v476
        %v492 = vpack.c.bf16 %v479, %v478
        %v493 = vpack.c.bf16 %v481, %v480
        %v494 = vpack.c.bf16 %v483, %v482
        %v495 = vpack.c.bf16 %v485, %v484
        %v496 = vpack.c.bf16 %v487, %v486
        %v497 = vpack.c.bf16 %v489, %v488
        %v498 = vld [vmem:[%s3] sm:$0xf]
        %v499 = vld [vmem:[%s3 + $0x4] sm:$0xf]
        %v500 = vld [vmem:[%s3 + $0x8] sm:$0xf]
        %v501 = vld [vmem:[%s3 + $0xc] sm:$0xf]
        %v502 = vld [vmem:[%s4] sm:$0x1]
        %v504 = vlaneseq
        %v505 = vshrl.u32 %v504, 7
        %v506 = vsub.s32 0, %v505
        %v507 = vrot.slane %v502, %v506
        %v513 = vunpack.c.l.b16 %v498
        %v514 = vunpack.c.l.b16 %v499
        %v515 = vunpack.c.l.b16 %v500
        %v516 = vunpack.c.l.b16 %v501
        %v517 = vpack.c.b16 %v514, %v513
        %v518 = vpack.c.b16 %v516, %v515
        %vm521 = vcmask 261120
        %v523 = vsel %vm521, %v490, 0
        %v526 = vsel %vm521, %v491, 0
        %v529 = vsel %vm521, %v492, 0
        %v532 = vsel %vm521, %v493, 0
        %v535 = vsel %vm521, %v494, 0
        %v538 = vsel %vm521, %v495, 0
        %v541 = vsel %vm521, %v496, 0
        %v544 = vsel %vm521, %v497, 0
        %546 = vmatprep.subr.bf16.mxu0 0
        %547 = vmatpush1.bf16.msra.mxu0 %v517
        %548 = vmatprep.subr.bf16.mxu0 0
        %549 = vmatpush1.bf16.msra.mxu0 %v518
        %550 = vmatprep.subr.bf16.mxu0 0
        %551 = vmatpush1.bf16.msra.mxu0 0
        %552 = vmatprep.subr.bf16.mxu0 0
        %553 = vmatpush1.bf16.msra.mxu0 0
        %554 = vmatprep.subr.bf16.mxu0 0
        %555 = vmatpush1.bf16.msra.mxu0 0
        %556 = vmatprep.subr.bf16.mxu0 0
        %557 = vmatpush1.bf16.msra.mxu0 0
        %558 = vmatprep.subr.bf16.mxu0 0
        %559 = vmatpush1.bf16.msra.mxu0 0
        %560 = vmatprep.subr.bf16.mxu0 0
        %561 = vmatpush1.bf16.msra.mxu0 0
        %562 = vmatprep.subr.bf16.mxu0 0
        %563 = vmatpush1.bf16.msra.mxu0 0
        %564 = vmatprep.subr.bf16.mxu0 0
        %565 = vmatpush1.bf16.msra.mxu0 0
        %566 = vmatprep.subr.bf16.mxu0 0
        %567 = vmatpush1.bf16.msra.mxu0 0
        %568 = vmatprep.subr.bf16.mxu0 0
        %569 = vmatpush1.bf16.msra.mxu0 0
        %570 = vmatprep.subr.bf16.mxu0 0
        %571 = vmatpush1.bf16.msra.mxu0 0
        %572 = vmatprep.subr.bf16.mxu0 0
        %573 = vmatpush1.bf16.msra.mxu0 0
        %574 = vmatprep.subr.bf16.mxu0 0
        %575 = vmatpush1.bf16.msra.mxu0 0
        %576 = vmatprep.subr.bf16.mxu0 0
        %577 = vmatpush1.bf16.msra.mxu0 0
        %578 = vmatprep.mubr.bf16.mxu0 0
        %579 = vmatmul.mubr.bf16.gmra.mrb[0].mxu0 %v523
        %v580 = vpop.f32.mrb[0].mxu0
        %v581 = vadd.f32 %v507, %v580
        %v582 = vpop.f32.mrb[0].mxu0
        %v583 = vpop.f32.mrb[0].mxu0
        %v584 = vadd.f32 %v507, %v583
        %v585 = vpop.f32.mrb[0].mxu0
        %586 = vmatprep.mubr.bf16.mxu0 0
        %587 = vmatmul.mubr.bf16.gmra.mrb[0].mxu0 %v526
        %v588 = vpop.f32.mrb[0].mxu0
        %v589 = vadd.f32 %v507, %v588
        %v590 = vpop.f32.mrb[0].mxu0
        %v591 = vpop.f32.mrb[0].mxu0
        %v592 = vadd.f32 %v507, %v591
        %v593 = vpop.f32.mrb[0].mxu0
        %594 = vmatprep.mubr.bf16.mxu0 0
        %595 = vmatmul.mubr.bf16.gmra.mrb[0].mxu0 %v529
        %v596 = vpop.f32.mrb[0].mxu0
        %v597 = vadd.f32 %v507, %v596
        %v598 = vpop.f32.mrb[0].mxu0
        %v599 = vpop.f32.mrb[0].mxu0
        %v600 = vadd.f32 %v507, %v599
        %v601 = vpop.f32.mrb[0].mxu0
        %602 = vmatprep.mubr.bf16.mxu0 0
        %603 = vmatmul.mubr.bf16.gmra.mrb[0].mxu0 %v532
        %v604 = vpop.f32.mrb[0].mxu0
        %v605 = vadd.f32 %v507, %v604
        %v606 = vpop.f32.mrb[0].mxu0
        %v607 = vpop.f32.mrb[0].mxu0
        %v608 = vadd.f32 %v507, %v607
        %v609 = vpop.f32.mrb[0].mxu0
        %610 = vmatprep.mubr.bf16.mxu0 0
        %611 = vmatmul.mubr.bf16.gmra.mrb[0].mxu0 %v535
        %v612 = vpop.f32.mrb[0].mxu0
        %v613 = vadd.f32 %v507, %v612
        %v614 = vpop.f32.mrb[0].mxu0
        %v615 = vpop.f32.mrb[0].mxu0
        %v616 = vadd.f32 %v507, %v615
        %v617 = vpop.f32.mrb[0].mxu0
        %618 = vmatprep.mubr.bf16.mxu0 0
        %619 = vmatmul.mubr.bf16.gmra.mrb[0].mxu0 %v538
        %v620 = vpop.f32.mrb[0].mxu0
        %v621 = vadd.f32 %v507, %v620
        %v622 = vpop.f32.mrb[0].mxu0
        %v623 = vpop.f32.mrb[0].mxu0
        %v624 = vadd.f32 %v507, %v623
        %v625 = vpop.f32.mrb[0].mxu0
        %626 = vmatprep.mubr.bf16.mxu0 0
        %627 = vmatmul.mubr.bf16.gmra.mrb[0].mxu0 %v541
        %v628 = vpop.f32.mrb[0].mxu0
        %v629 = vadd.f32 %v507, %v628
        %v630 = vpop.f32.mrb[0].mxu0
        %v631 = vpop.f32.mrb[0].mxu0
        %v632 = vadd.f32 %v507, %v631
        %v633 = vpop.f32.mrb[0].mxu0
        %634 = vmatprep.mubr.bf16.mxu0 0
        %635 = vmatmul.mubr.bf16.gmra.mrb[0].mxu0 %v544
        %v636 = vpop.f32.mrb[0].mxu0
        %v637 = vadd.f32 %v507, %v636
        %v638 = vpop.f32.mrb[0].mxu0
        %v639 = vpop.f32.mrb[0].mxu0
        %v640 = vadd.f32 %v507, %v639
        %v641 = vpop.f32.mrb[0].mxu0
        %642 = vdwg.mxu0
        %v643 = vtanh.pop %v581
        %v644 = vtanh.pop %v584
        %v645 = vtanh.pop %v589
        %v646 = vtanh.pop %v592
        %v647 = vtanh.pop %v597
        %v648 = vtanh.pop %v600
        %v649 = vtanh.pop %v605
        %v650 = vtanh.pop %v608
        %v651 = vtanh.pop %v613
        %v652 = vtanh.pop %v616
        %v653 = vtanh.pop %v621
        %v654 = vtanh.pop %v624
        %v655 = vtanh.pop %v629
        %v656 = vtanh.pop %v632
        %v657 = vtanh.pop %v637
        %v658 = vtanh.pop %v640
        %v659 = vld [vmem:[%s5] sm:$0x1]
        %v660 = vpack.c.bf16 %v644, %v643
        %v661 = vpack.c.bf16 %v646, %v645
        %v662 = vpack.c.bf16 %v648, %v647
        %v663 = vpack.c.bf16 %v650, %v649
        %v664 = vpack.c.bf16 %v652, %v651
        %v665 = vpack.c.bf16 %v654, %v653
        %v666 = vpack.c.bf16 %v656, %v655
        %v667 = vpack.c.bf16 %v658, %v657
        %v668 = vld [vmem:[#allocation2] sm:$0x1]
        %670 = vset.pattern.permute.xlu0 0
        %671 = vperm.xlu0 %670, %v668
        %v672 = vpop.permute.xlu0 %671
        %v674 = vlaneseq
        %v675 = vshrl.u32 %v674, 7
        %v676 = vsub.s32 0, %v675
        %v677 = vrot.slane %v672, %v676
        %v679 = vsel %vm521, %v659, 0
        %v682 = vsel %vm521, %v660, 0
        %v685 = vsel %vm521, %v661, 0
        %v688 = vsel %vm521, %v662, 0
        %v691 = vsel %vm521, %v663, 0
        %v694 = vsel %vm521, %v664, 0
        %v697 = vsel %vm521, %v665, 0
        %v700 = vsel %vm521, %v666, 0
        %v703 = vsel %vm521, %v667, 0
        %705 = vmatprep.subr.bf16.mxu0 0
        %706 = vmatpush1.bf16.xpose.msra.mxu0 %v682
        %707 = vmatprep.subr.bf16.mxu0 0
        %708 = vmatpush1.bf16.xpose.msra.mxu0 %v685
        %709 = vmatprep.subr.bf16.mxu0 0
        %710 = vmatpush1.bf16.xpose.msra.mxu0 %v688
        %711 = vmatprep.subr.bf16.mxu0 0
        %712 = vmatpush1.bf16.xpose.msra.mxu0 %v691
        %713 = vmatprep.subr.bf16.mxu0 0
        %714 = vmatpush1.bf16.xpose.msra.mxu0 %v694
        %715 = vmatprep.subr.bf16.mxu0 0
        %716 = vmatpush1.bf16.xpose.msra.mxu0 %v697
        %717 = vmatprep.subr.bf16.mxu0 0
        %718 = vmatpush1.bf16.xpose.msra.mxu0 %v700
        %719 = vmatprep.subr.bf16.mxu0 0
        %720 = vmatpush1.bf16.xpose.msra.mxu0 %v703
        %721 = vmatprep.subr.bf16.mxu0 0
        %722 = vmatpush1.bf16.xpose.msra.mxu0 0
        %723 = vmatprep.subr.bf16.mxu0 0
        %724 = vmatpush1.bf16.xpose.msra.mxu0 0
        %725 = vmatprep.subr.bf16.mxu0 0
        %726 = vmatpush1.bf16.xpose.msra.mxu0 0
        %727 = vmatprep.subr.bf16.mxu0 0
        %728 = vmatpush1.bf16.xpose.msra.mxu0 0
        %729 = vmatprep.subr.bf16.mxu0 0
        %730 = vmatpush1.bf16.xpose.msra.mxu0 0
        %731 = vmatprep.subr.bf16.mxu0 0
        %732 = vmatpush1.bf16.xpose.msra.mxu0 0
        %733 = vmatprep.subr.bf16.mxu0 0
        %734 = vmatpush1.bf16.xpose.msra.mxu0 0
        %735 = vmatprep.subr.bf16.mxu0 0
        %736 = vmatpush1.bf16.xpose.msra.mxu0 0
        %737 = vmatprep.mubr.bf16.mxu0 0
        %738 = vmatmul.mubr.bf16.gmra.mrb[0].mxu0 %v679
        %v739 = vpop.f32.mrb[0].mxu0
        %v740 = vadd.f32 %v677, %v739
        %v741 = vpop.f32.mrb[0].mxu0
        %v742 = vpop.f32.mrb[0].mxu0
        %v743 = vpop.f32.mrb[0].mxu0
        %744 = vdwg.mxu0
        %745 = vst [vmem:[%s273] sm:$0x1] %v740
        %s746 = sand.u32 %s183, 1
        %s747 = scalar_lea.sflag [#allocation4], %s746
        %s748 = sand.u32 %s183, 1
        %s749 = scalar_lea.vmem [#allocation3], %s748
        // Predicated region
        $region49: #{tpu_custom_call.1} parent=47 // pred_check
          %p750 = pneg %p193
        $region50: #{tpu_custom_call.1} parent=47 // pred_check_branch
          %752 = sbr.rel (%p750) target = $region52
        $region51: #{tpu_custom_call.1} parent=47 // pred_region
          %s754 = ssub.s32 16, 16
          %755 = vsyncadd %s747, %s754
          %s756 = smul.addr %s23, 16
          %s757 = scalar_lea.hbm %s7, %s756
          %s759 = sshll.u32 %s749, 4
          %s760 = int_to_ptr.vmem [resolvable:$true] %s759
          %762 = dma.vmem_to_hbm [thread:$0]  %s760, 16, %s757, %s747
        $region52: #{tpu_custom_call.1} parent=47 // pred_fallthru
          _
      $region48: #{tpu_custom_call.1} parent=5 // pred_fallthru
        _
      %p763 = scmp.le.s32.totalorder 2, %s18
      // Predicated region
      $region53: #{tpu_custom_call.1} parent=5 // pred_check
        %p764 = pneg %p763
      $region54: #{tpu_custom_call.1} parent=5 // pred_check_branch
        %766 = sbr.rel (%p764) target = $region56
      $region55: #{tpu_custom_call.1} parent=5 // pred_region
        %s767 = ssub.s32 %s18, 2
        // Predicated region
        $region57: #{tpu_custom_call.1} parent=55 // pred_check
          %p768 = pneg %p199
        $region58: #{tpu_custom_call.1} parent=55 // pred_check_branch
          %770 = sbr.rel (%p768) target = $region60
        $region59: #{tpu_custom_call.1} parent=55 // pred_region
          %s771 = sand.u32 %s184, 1
          %s772 = scalar_lea.sflag [#allocation4], %s771
          %s773 = sand.u32 %s184, 1
          %s774 = scalar_lea.vmem [#allocation3], %s773
          %775 = dma.done %s772, 16
        $region60: #{tpu_custom_call.1} parent=55 // pred_fallthru
          _
      $region56: #{tpu_custom_call.1} parent=5 // pred_fallthru
        _
    $region6: #{tpu_custom_call.1} parent=1 // loop_footer
      %s22 = sadd.s32 1, %s18
    $region7: #{tpu_custom_call.1} parent=1 // loop_footer_branch
      %17 = sbr.rel target = $region3
    $region8: #{tpu_custom_call.1} parent=1 // loop_exit
      _
    %776 = vsyncpa [#allocation4], 1
    %s777 = scalar_lea.sflag [#allocation4], 1
    %778 = vsyncpa %s777, 1

</llo_original>
